<compile_context>
chip_gen: v6e
topology: v6e:2x2x1
jax: 0.10.0
libtpu: 0.0.40
codegen_flags: <defaults>
</compile_context>

<pallas_src>
import functools

import jax
import jax.numpy as jnp
from jax import lax
from jax.experimental import pallas as pl
from jax.experimental.pallas import tpu as pltpu


def _focal_loss_kernel(logits_ref, targets_ref, mask_ref, out_ref, acc_ref, *,
                       alpha, gamma, valid_rows):
    """Grid = (batch, core_split, row_blocks). acc_ref is an (8, T) f32 scratch
    resident across the row_blocks ('arbitrary') axis."""
    n = pl.program_id(2)

    @pl.when(n == 0)
    def _():
        acc_ref[...] = jnp.zeros_like(acc_ref)

    tn, tt = logits_ref.shape
    base = n * tn                        # first row covered by this block
    ragged = (valid_rows % tn) != 0      # static: only last block can be ragged

    def slab_loss(row0, rows):
        """Per-element focal loss for `rows` query rows starting at `row0`.
        Slab-wise processing bounds elementwise temporaries to O(rows*T)."""
        x = logits_ref[pl.ds(row0, rows), :].astype(jnp.float32)
        t = targets_ref[pl.ds(row0, rows), :].astype(jnp.float32)

        # One shared transcendental: e = exp(-|x|) feeds both BCE and sigmoid.
        e = jnp.exp(-jnp.abs(x))
        # Stable BCE-with-logits.  Keep log1p (log(1+e) underflows for big |x|).
        ce = jnp.maximum(x, 0.0) - x * t + jnp.log1p(e)
        # sigmoid(x) from the same exp; approx reciprocal runs on the EUP only
        # (no VPU Newton refinement) -- ~1e-4 rel. error, fine for a summed loss.
        r = pl.reciprocal(1.0 + e, approx=True)
        p = jnp.where(x >= 0.0, r, 1.0 - r)

        # q = 1 - p_t = p + t - 2*p*t
        q = p + t * (1.0 - 2.0 * p)

        # Modulating factor: integer gamma -> repeated multiply (no exp/log pow).
        if float(gamma).is_integer() and gamma >= 0:
            g = int(gamma)
            mod = jnp.ones_like(q) if g == 0 else q
            for _ in range(max(g - 1, 0)):
                mod = mod * q
        else:
            mod = q ** gamma

        loss = ce * mod
        if alpha >= 0:
            # alpha_t = alpha*t + (1-alpha)*(1-t), constants folded.
            loss = ((1.0 - alpha) + (2.0 * alpha - 1.0) * t) * loss

        # Padded (garbage) rows of a ragged trailing block: where-SELECT so any
        # NaN/Inf garbage is neutralized.  Do NOT turn this into a multiply.
        if ragged:
            rid = base + row0 + lax.broadcasted_iota(jnp.int32, (rows, tt), 0)
            loss = jnp.where(rid < valid_rows, loss, 0.0)
        return loss

    def accum(row0, rows):               # rows is a multiple of 8
        loss = slab_loss(row0, rows)
        if rows == 8:
            acc_ref[...] += loss
        else:
            acc_ref[...] += jnp.sum(loss.reshape(rows // 8, 8, tt), axis=0)

    if tn % 8 == 0:
        # Slab size: largest of 64/32/16/8 dividing the block's rows.
        slab = next(s for s in (64, 32, 16, 8) if tn % s == 0)
        n_slabs = tn // slab
        if n_slabs <= 4:
            for s in range(n_slabs):     # tiny: fully unrolled at trace time
                accum(s * slab, slab)
        else:
            @pl.loop(0, n_slabs)
            def _(s):
                accum(pl.multiple_of(s * slab, slab), slab)
    else:
        # Tiny full-rows block that is not a multiple of 8.
        full8, rem = divmod(tn, 8)
        for g in range(full8):
            accum(g * 8, 8)
        if rem:
            acc_ref[0:rem, :] += slab_loss(full8 * 8, rem)

    # Finalize: the token mask is per (batch, token), constant over query rows,
    # so apply it ONCE to the accumulator (where-select keeps it NaN/Inf safe),
    # then a single lane-dense (8, T) store per (batch, core) cell.
    @pl.when(n == pl.num_programs(2) - 1)
    def _():
        m = mask_ref[...] > 0                              # (1, T)
        out_ref[...] = jnp.where(m, acc_ref[...], 0.0)


def _vmem_budgets():
    """(per-input block byte target, scoped VMEM limit), generation-aware:
    v7x-class chips only have 64 MiB physical VMEM -> 4 MiB tiles / 32 MiB
    scoped; v5e/v6e (128 MiB) take 6 MiB tiles / 48 MiB scoped."""
    try:
        info = pltpu.get_tpu_info()
        cap = int(getattr(info, "vmem_capacity_bytes", 64 << 20))
    except Exception:  # unknown backend -> be conservative
        cap = 64 << 20
    if cap <= (64 << 20):
        return 4 << 20, 32 << 20
    return 6 << 20, 48 << 20


def _row_tile(rows, cols, itemsize, target_bytes):
    """Rows per block: the whole row axis if one block fits target_bytes, else
    the largest multiple of 8 that keeps one input block under target_bytes."""
    if rows * cols * itemsize <= target_bytes:
        return int(rows)
    r = (target_bytes // max(1, cols * itemsize)) // 8 * 8
    return int(min(rows, max(8, r)))


def token_sigmoid_focal_loss(logits, targets, text_masks=None, *, alpha, gamma):
    """Scalar sum of the per-element binary focal loss over unmasked tokens.
    Feed logits/targets in bf16 (targets are {0,1} -> exact) to halve HBM
    traffic; the kernel upcasts to f32 internally (no wrapper-side casts)."""
    assert logits.ndim == 3 and targets.ndim == 3
    B, N, T = logits.shape
    if text_masks is None:
        text_masks = jnp.ones((B, T), dtype=jnp.float32)
    assert text_masks.ndim == 2

    # Lane-density guard for production shapes: pad T to a multiple of 128.
    # Padded tokens carry mask = 0 so they contribute nothing.
    t_pad = max(128, -(-T // 128) * 128)
    if t_pad != T:
        logits = jnp.pad(logits, ((0, 0), (0, 0), (0, t_pad - T)))
        targets = jnp.pad(targets, ((0, 0), (0, 0), (0, t_pad - T)))
        text_masks = jnp.pad(text_masks, ((0, 0), (0, t_pad - T)))
        T = t_pad

    # Split the query axis across the (up to 2) TensorCores of a v7x chip.
    # Harmless on single-core chips: the extra 'parallel' axis just iterates.
    nc = 2 if (N % 2 == 0 and N >= 16) else 1
    rows = N // nc
    logits4 = logits.reshape(B, nc, rows, T)     # contiguous -> free reshape
    targets4 = targets.reshape(B, nc, rows, T)
    mask4 = text_masks.reshape(B, 1, 1, T)

    target_bytes, vmem_limit = _vmem_budgets()
    itemsize = max(jnp.dtype(logits.dtype).itemsize,
                   jnp.dtype(targets.dtype).itemsize)
    tn = _row_tile(rows, T, itemsize, target_bytes)
    n_blocks = pl.cdiv(rows, tn)

    kernel = functools.partial(_focal_loss_kernel, alpha=float(alpha),
                               gamma=float(gamma), valid_rows=rows)

    elems = B * N * T
    cost = pl.CostEstimate(
        flops=16 * elems,
        transcendentals=3 * elems,
        bytes_accessed=int(logits.size * jnp.dtype(logits.dtype).itemsize
                           + targets.size * jnp.dtype(targets.dtype).itemsize
                           + text_masks.size * jnp.dtype(text_masks.dtype).itemsize
                           + B * nc * 8 * T * 4),
    )

    partial_sums = pl.pallas_call(
        kernel,
        out_shape=jax.ShapeDtypeStruct((B, nc, 8, T), jnp.float32),
        grid_spec=pltpu.PrefetchScalarGridSpec(
            num_scalar_prefetch=0,
            grid=(B, nc, n_blocks),
            in_specs=[
                pl.BlockSpec((None, None, tn, T), lambda b, c, n: (b, c, n, 0)),
                pl.BlockSpec((None, None, tn, T), lambda b, c, n: (b, c, n, 0)),
                # Per-batch token mask: DMA'd once per batch row, reused across
                # the core-split and row-block axes.
                pl.BlockSpec((None, None, 1, T), lambda b, c, n: (b, 0, 0, 0)),
            ],
            out_specs=pl.BlockSpec((None, None, 8, T),
                                   lambda b, c, n: (b, c, 0, 0)),
            scratch_shapes=[pltpu.VMEM((8, T), jnp.float32)],
        ),
        compiler_params=pltpu.CompilerParams(
            dimension_semantics=("parallel", "parallel", "arbitrary"),
            vmem_limit_bytes=vmem_limit,
        ),
        cost_estimate=cost,
    )(logits4, targets4, mask4)

    # Tiny trailing cross-lane reduction of the per-(batch, core) partials.
    return jnp.sum(partial_sums)


def _reference(logits, targets, text_masks, alpha, gamma):
    # Pure-JAX reference mirroring the PyTorch semantics.
    x = logits.astype(jnp.float32)
    t = targets.astype(jnp.float32)
    p = jax.nn.sigmoid(x)
    ce = jnp.maximum(x, 0.0) - x * t + jnp.log1p(jnp.exp(-jnp.abs(x)))
    p_t = p * t + (1.0 - p) * (1.0 - t)
    loss = ce * (1.0 - p_t) ** gamma
    if alpha >= 0:
        alpha_t = alpha * t + (1.0 - alpha) * (1.0 - t)
        loss = alpha_t * loss
    if text_masks is not None:
        loss = loss * (text_masks > 0).astype(jnp.float32)[:, None, :]
    return jnp.sum(loss)


if __name__ == "__main__":
    # Module hyperparameters (deterministic, in-script).
    ALPHA = 0.25
    GAMMA = 2.0

    B, N, T = 2, 16, 128  # batch, queries, text tokens (N=16 exercises NC=2)
    key = jax.random.PRNGKey(0)
    k1, k2, k3 = jax.random.split(key, 3)

    # bf16 HBM streams: targets are {0,1} so bf16 is exact; logits rounded to
    # bf16 are used identically by kernel and reference.
    logits = jax.random.normal(k1, (B, N, T), dtype=jnp.float32).astype(jnp.bfloat16)
    targets = (jax.random.uniform(k2, (B, N, T)) > 0.7).astype(jnp.bfloat16)
    # Simulate variable-length text: mask out a subset of tokens per batch.
    text_masks = (jax.random.uniform(k3, (B, T)) > 0.3).astype(jnp.float32)

    out = token_sigmoid_focal_loss(logits, targets, text_masks,
                                   alpha=ALPHA, gamma=GAMMA)
    out = jax.block_until_ready(out)

    ref = _reference(logits, targets, text_masks, ALPHA, GAMMA)
    # Tolerance loosened for the approx-reciprocal sigmoid (~1e-4 rel/element).
    assert jnp.allclose(out, ref, rtol=5e-3, atol=1e-2), (out, ref)

    print("KERNEL_OK")
</pallas_src>

<mosaic_0001>
module attributes {stable_mosaic.version = 11 : i64} {
  func.func @_focal_loss_kernel(%arg0: i32, %arg1: i32, %arg2: i32, %arg3: memref<1x1x8x128xbf16, #tpu.memory_space<vmem>>, %arg4: memref<1x1x8x128xbf16, #tpu.memory_space<vmem>>, %arg5: memref<1x1x1x128xf32, #tpu.memory_space<vmem>>, %arg6: memref<1x1x8x128xf32, #tpu.memory_space<vmem>>, %arg7: memref<8x128xf32, #tpu.memory_space<vmem>>) attributes {dimension_semantics = [#tpu.dimension_semantics<parallel>, #tpu.dimension_semantics<parallel>, #tpu.dimension_semantics<arbitrary>], iteration_bounds = array<i64: 2, 2, 1>, scalar_prefetch = 0 : i64, scratch_operands = 1 : i64, tpu.core_type = #tpu.core_type<tc>, window_params = [{transform_indices = @transform_0, window_bounds = array<i64: 1, 1, 8, 128>}, {transform_indices = @transform_1, window_bounds = array<i64: 1, 1, 8, 128>}, {transform_indices = @transform_2, window_bounds = array<i64: 1, 1, 1, 128>}, {transform_indices = @transform_3, window_bounds = array<i64: 1, 1, 8, 128>}]} {
    %c0_i32 = arith.constant 0 : i32
    %0 = arith.cmpi eq, %arg2, %c0_i32 : i32
    %1 = arith.extui %0 : i1 to i32
    %c0_i32_0 = arith.constant 0 : i32
    %2 = arith.cmpi ne, %1, %c0_i32_0 : i32
    scf.if %2 {
      %cst_22 = arith.constant 0.000000e+00 : f32
      %46 = vector.broadcast %cst_22 : f32 to vector<8x128xf32>
      %c0_23 = arith.constant 0 : index
      %c0_24 = arith.constant 0 : index
      %47 = vector.load %arg7[%c0_23, %c0_24] : memref<8x128xf32, #tpu.memory_space<vmem>>, vector<8x128xf32>
      tpu.vector_store %arg7[%c0_23, %c0_24], %46 {strides = array<i32>} : memref<8x128xf32, #tpu.memory_space<vmem>>, vector<8x128xf32>,
    } else {
    }
    %c0 = arith.constant 0 : index
    %c0_1 = arith.constant 0 : index
    %c0_2 = arith.constant 0 : index
    %c0_3 = arith.constant 0 : index
    %3 = vector.load %arg3[%c0, %c0_1, %c0_2, %c0_3] : memref<1x1x8x128xbf16, #tpu.memory_space<vmem>>, vector<1x1x8x128xbf16>
    %4 = vector.shape_cast %3 : vector<1x1x8x128xbf16> to vector<8x128xbf16>
    %5 = arith.extf %4 : vector<8x128xbf16> to vector<8x128xf32>
    %c0_4 = arith.constant 0 : index
    %c0_5 = arith.constant 0 : index
    %c0_6 = arith.constant 0 : index
    %c0_7 = arith.constant 0 : index
    %6 = vector.load %arg4[%c0_4, %c0_5, %c0_6, %c0_7] : memref<1x1x8x128xbf16, #tpu.memory_space<vmem>>, vector<1x1x8x128xbf16>
    %7 = vector.shape_cast %6 : vector<1x1x8x128xbf16> to vector<8x128xbf16>
    %8 = arith.extf %7 : vector<8x128xbf16> to vector<8x128xf32>
    %9 = math.absf %5 : vector<8x128xf32>
    %cst = arith.constant 0.000000e+00 : f32
    %10 = vector.broadcast %cst : f32 to vector<8x128xf32>
    %11 = arith.subf %10, %9 : vector<8x128xf32>
    %12 = math.exp %11 : vector<8x128xf32>
    %cst_8 = arith.constant 0.000000e+00 : f32
    %13 = vector.broadcast %cst_8 : f32 to vector<8x128xf32>
    %14 = arith.maximumf %5, %13 : vector<8x128xf32>
    %15 = arith.mulf %5, %8 : vector<8x128xf32>
    %16 = arith.subf %14, %15 : vector<8x128xf32>
    %17 = math.log1p %12 : vector<8x128xf32>
    %18 = arith.addf %16, %17 : vector<8x128xf32>
    %cst_9 = arith.constant 1.000000e+00 : f32
    %19 = vector.broadcast %cst_9 : f32 to vector<8x128xf32>
    %20 = arith.addf %19, %12 : vector<8x128xf32>
    %21 = tpu.reciprocal %20 {approx = true} : vector<8x128xf32> -> vector<8x128xf32>
    %cst_10 = arith.constant 0.000000e+00 : f32
    %22 = vector.broadcast %cst_10 : f32 to vector<8x128xf32>
    %23 = arith.cmpf oge, %5, %22 : vector<8x128xf32>
    %cst_11 = arith.constant 1.000000e+00 : f32
    %24 = vector.broadcast %cst_11 : f32 to vector<8x128xf32>
    %25 = arith.subf %24, %21 : vector<8x128xf32>
    %26 = arith.select %23, %21, %25 : vector<8x128xi1>, vector<8x128xf32>
    %cst_12 = arith.constant 2.000000e+00 : f32
    %27 = vector.broadcast %cst_12 : f32 to vector<8x128xf32>
    %28 = arith.mulf %27, %26 : vector<8x128xf32>
    %cst_13 = arith.constant 1.000000e+00 : f32
    %29 = vector.broadcast %cst_13 : f32 to vector<8x128xf32>
    %30 = arith.subf %29, %28 : vector<8x128xf32>
    %31 = arith.mulf %8, %30 : vector<8x128xf32>
    %32 = arith.addf %26, %31 : vector<8x128xf32>
    %33 = arith.mulf %32, %32 : vector<8x128xf32>
    %34 = arith.mulf %18, %33 : vector<8x128xf32>
    %cst_14 = arith.constant -5.000000e-01 : f32
    %35 = vector.broadcast %cst_14 : f32 to vector<8x128xf32>
    %36 = arith.mulf %35, %8 : vector<8x128xf32>
    %cst_15 = arith.constant 7.500000e-01 : f32
    %37 = vector.broadcast %cst_15 : f32 to vector<8x128xf32>
    %38 = arith.addf %37, %36 : vector<8x128xf32>
    %39 = arith.mulf %38, %34 : vector<8x128xf32>
    %c0_16 = arith.constant 0 : index
    %c0_17 = arith.constant 0 : index
    %40 = vector.load %arg7[%c0_16, %c0_17] : memref<8x128xf32, #tpu.memory_space<vmem>>, vector<8x128xf32>
    %41 = arith.addf %40, %39 : vector<8x128xf32>
    %c0_18 = arith.constant 0 : index
    %c0_19 = arith.constant 0 : index
    %42 = vector.load %arg7[%c0_18, %c0_19] : memref<8x128xf32, #tpu.memory_space<vmem>>, vector<8x128xf32>
    tpu.vector_store %arg7[%c0_18, %c0_19], %41 {strides = array<i32>} : memref<8x128xf32, #tpu.memory_space<vmem>>, vector<8x128xf32>,
    %c0_i32_20 = arith.constant 0 : i32
    %43 = arith.cmpi eq, %arg2, %c0_i32_20 : i32
    %44 = arith.extui %43 : i1 to i32
    %c0_i32_21 = arith.constant 0 : i32
    %45 = arith.cmpi ne, %44, %c0_i32_21 : i32
    scf.if %45 {
      %c0_22 = arith.constant 0 : index
      %c0_23 = arith.constant 0 : index
      %c0_24 = arith.constant 0 : index
      %c0_25 = arith.constant 0 : index
      %46 = vector.load %arg5[%c0_22, %c0_23, %c0_24, %c0_25] : memref<1x1x1x128xf32, #tpu.memory_space<vmem>>, vector<1x1x1x128xf32>
      %47 = vector.shape_cast %46 : vector<1x1x1x128xf32> to vector<1x128xf32>
      %cst_26 = arith.constant 0.000000e+00 : f32
      %48 = vector.broadcast %cst_26 : f32 to vector<1x128xf32>
      %49 = arith.cmpf ogt, %47, %48 : vector<1x128xf32>
      %c0_27 = arith.constant 0 : index
      %c0_28 = arith.constant 0 : index
      %50 = vector.load %arg7[%c0_27, %c0_28] : memref<8x128xf32, #tpu.memory_space<vmem>>, vector<8x128xf32>
      %cst_29 = arith.constant 0.000000e+00 : f32
      %51 = vector.shape_cast %49 : vector<1x128xi1> to vector<1x128xi1>
      %52 = vector.broadcast %51 : vector<1x128xi1> to vector<8x128xi1>
      %53 = vector.broadcast %cst_29 : f32 to vector<8x128xf32>
      %54 = arith.select %52, %50, %53 : vector<8x128xi1>, vector<8x128xf32>
      %c0_30 = arith.constant 0 : index
      %c0_31 = arith.constant 0 : index
      %c0_32 = arith.constant 0 : index
      %c0_33 = arith.constant 0 : index
      %55 = vector.load %arg6[%c0_30, %c0_31, %c0_32, %c0_33] : memref<1x1x8x128xf32, #tpu.memory_space<vmem>>, vector<1x1x8x128xf32>
      %56 = vector.shape_cast %55 : vector<1x1x8x128xf32> to vector<8x128xf32>
      %57 = vector.shape_cast %54 : vector<8x128xf32> to vector<1x1x8x128xf32>
      tpu.vector_store %arg6[%c0_30, %c0_31, %c0_32, %c0_33], %57 {strides = array<i32>} : memref<1x1x8x128xf32, #tpu.memory_space<vmem>>, vector<1x1x8x128xf32>,
    } else {
    }
    return
  }
  func.func @transform_0(%arg0: i32, %arg1: i32, %arg2: i32) -> (i32, i32, i32, i32) {
    %c0_i32 = arith.constant 0 : i32
    %c0_i32_0 = arith.constant 0 : i32
    return %arg0, %arg1, %arg2, %c0_i32 : i32, i32, i32, i32
  }
  func.func @transform_1(%arg0: i32, %arg1: i32, %arg2: i32) -> (i32, i32, i32, i32) {
    %c0_i32 = arith.constant 0 : i32
    %c0_i32_0 = arith.constant 0 : i32
    return %arg0, %arg1, %arg2, %c0_i32 : i32, i32, i32, i32
  }
  func.func @transform_2(%arg0: i32, %arg1: i32, %arg2: i32) -> (i32, i32, i32, i32) {
    %c0_i32 = arith.constant 0 : i32
    %c0_i32_0 = arith.constant 0 : i32
    %c0_i32_1 = arith.constant 0 : i32
    %c0_i32_2 = arith.constant 0 : i32
    return %arg0, %c0_i32, %c0_i32_0, %c0_i32_1 : i32, i32, i32, i32
  }
  func.func @transform_3(%arg0: i32, %arg1: i32, %arg2: i32) -> (i32, i32, i32, i32) {
    %c0_i32 = arith.constant 0 : i32
    %c0_i32_0 = arith.constant 0 : i32
    %c0_i32_1 = arith.constant 0 : i32
    return %arg0, %arg1, %c0_i32, %c0_i32_0 : i32, i32, i32, i32
  }
}

</mosaic_0001>

<llo_original>
// kernel: tpu_custom_call.1
$region0: #{tpu_custom_call.1}
  #allocation0 [shape = 'u32[]', space=smem, size = 0x4, offset = 0x4, fixed_abs, tag = 'smem constant byte address 0x4 - core index']
  #allocation1 [shape = 'u32[144,128]{1,0:T(1,128)}', space=vmem, size = 0x12000, scoped, tag = 'internal scratch']
  #allocation2 [shape = 'f32[8,128]{1,0:T(8,128)}', space=vmem, size = 0x1000, scoped, tag = 'scratch operand']
  %s0 = inlined_call_operand.hbm [shape: bf16[2,2,8,128], index: 0, kind: input, shape index: {}]
  %s1 = inlined_call_operand.hbm [shape: bf16[2,2,8,128], index: 1, kind: input, shape index: {}]
  %s2 = inlined_call_operand.vmem [shape: f32[2,1,1,128], index: 2, kind: input, shape index: {}]
  %s3 = inlined_call_operand.hbm [shape: f32[2,2,8,128], index: 3, kind: output, shape index: {}]
  %s4 = sld [smem:[#allocation0]]
  $region61: #{tpu_custom_call.1} parent=0
    _
  %s6 = ssub.s32 1, %s4
  %s7 = scalar_select 0, %s6, %s4
  $region1: #{tpu_custom_call.1} parent=0
    #allocation3 [shape = 'u8[4096]{0}', space=vmem, size = 0x1000, scoped, tag = 'input window, operand 0']
    #allocation4 [shape = 's32[2]{0}', space=sflag, size = 0x8, scoped, tag = 'scoped memory for tpu_custom_call.1']
    #allocation5 [shape = 's32[2]{0}', space=sflag, size = 0x8, scoped, tag = 'scoped memory for tpu_custom_call.1']
    #allocation6 [shape = 'u8[4096]{0}', space=vmem, size = 0x1000, scoped, tag = 'input window, operand 1']
    #allocation7 [shape = 's32[2]{0}', space=sflag, size = 0x8, scoped, tag = 'scoped memory for tpu_custom_call.1']
    #allocation8 [shape = 'u8[8192]{0}', space=vmem, size = 0x2000, scoped, tag = 'output window, operand 0']
    %8 = vsyncpa [#allocation4], 0
    %s9 = scalar_lea.sflag [#allocation4], 1
    %10 = vsyncpa %s9, 0
    %11 = vsyncpa [#allocation7], 0
    %s12 = scalar_lea.sflag [#allocation7], 1
    %13 = vsyncpa %s12, 0
    %14 = vsyncpa [#allocation5], 0
    %s15 = scalar_lea.sflag [#allocation5], 1
    %16 = vsyncpa %s15, 0
    loop: start=0, step=1, limit=6
    $region2: #{tpu_custom_call.1} parent=1 // loop_pre_header
      _
    $region3: #{tpu_custom_call.1} parent=1 // loop_header
      %s18 = sphi 0, %s22
      %p19 = scmp.ge.s32.totalorder %s18, 6
      %s25 = sphi 0, %s44
      %s26 = sphi 0, %s40
      %s27 = sphi 0, %s36
      %s28 = sphi 0, %s25
      %s29 = sphi 0, %s26
      %s30 = sphi 0, %s27
      %s31 = sphi 0, %s28
      %s32 = sphi 0, %s29
      %s33 = sphi 0, %s30
      %s51 = sphi 0, %s53
      %s54 = sphi 0, %s51
      %s55 = sphi 0, %s54
      %s71 = sphi 0, %s55
      %s81 = sphi 0, %s83
      %s84 = sphi 0, %s81
      %s85 = sphi 0, %s84
      %s101 = sphi 0, %s85
      %s107 = sphi 0, %s109
      %s110 = sphi 0, %s107
      %s111 = sphi 0, %s110
      %s127 = sphi 0, %s111
      %s135 = sphi 0, %s137
      %s138 = sphi 0, %s135
      %s139 = sphi 0, %s138
      %s155 = sphi 0, %s139
    $region4: #{tpu_custom_call.1} parent=1 // loop_header_branch
      %21 = sbr.rel (%p19) target = $region8
    $region5: #{tpu_custom_call.1} parent=1 // loop_body
      %s23 = ssub.s32 %s18, 1
      %s24 = ssub.s32 %s18, 2
      %s34 = sadd.s32 1, %s27
      %p35 = scmp.ge.s32.totalorder %s34, 1
      %s36 = scalar_select %p35, 0, %s34
      %s37 = sadd.s32 1, %s26
      %s38 = scalar_select %p35, %s37, %s26
      %p39 = scmp.ge.s32.totalorder %s38, 2
      %s40 = scalar_select %p39, 0, %s38
      %s41 = sadd.s32 1, %s25
      %s42 = scalar_select %p39, %s41, %s25
      %p43 = scmp.ge.s32.totalorder %s42, 2
      %s44 = scalar_select %p43, 0, %s42
      %s45 = ssub.s32 %s25, %s44
      %s46 = ssub.s32 %s26, %s40
      %s47 = sor.u32 %s45, %s46
      %s48 = ssub.s32 %s27, %s36
      %s49 = sor.u32 %s47, %s48
      %p50 = scmp.eq.s32.totalorder %s49, 0
      %s52 = sadd.s32 %s51, 1
      %s53 = scalar_select %p50, %s51, %s52
      %p56 = pneg %p50
      %p57 = scmp.eq.s32.totalorder %s18, 3
      %p58 = por %p56, %p57
      %p59 = scmp.ne.s32.totalorder %s51, %s54
      %p60 = scmp.eq.s32.totalorder %s18, 0
      %p61 = por %p59, %p60
      %p62 = scmp.ne.s32.totalorder %s51, %s54
      %p63 = scmp.eq.s32.totalorder %s23, 3
      %p64 = por %p62, %p63
      %p65 = scmp.ne.s32.totalorder %s54, %s55
      %p66 = scmp.eq.s32.totalorder %s23, 0
      %p67 = por %p65, %p66
      %p68 = scmp.ne.s32.totalorder %s54, %s55
      %p69 = scmp.eq.s32.totalorder %s24, 3
      %p70 = por %p68, %p69
      %p72 = scmp.ne.s32.totalorder %s55, %s71
      %p73 = scmp.eq.s32.totalorder %s24, 0
      %p74 = por %p72, %p73
      %s75 = ssub.s32 %s25, %s44
      %s76 = ssub.s32 %s26, %s40
      %s77 = sor.u32 %s75, %s76
      %s78 = ssub.s32 %s27, %s36
      %s79 = sor.u32 %s77, %s78
      %p80 = scmp.eq.s32.totalorder %s79, 0
      %s82 = sadd.s32 %s81, 1
      %s83 = scalar_select %p80, %s81, %s82
      %p86 = pneg %p80
      %p87 = scmp.eq.s32.totalorder %s18, 3
      %p88 = por %p86, %p87
      %p89 = scmp.ne.s32.totalorder %s81, %s84
      %p90 = scmp.eq.s32.totalorder %s18, 0
      %p91 = por %p89, %p90
      %p92 = scmp.ne.s32.totalorder %s81, %s84
      %p93 = scmp.eq.s32.totalorder %s23, 3
      %p94 = por %p92, %p93
      %p95 = scmp.ne.s32.totalorder %s84, %s85
      %p96 = scmp.eq.s32.totalorder %s23, 0
      %p97 = por %p95, %p96
      %p98 = scmp.ne.s32.totalorder %s84, %s85
      %p99 = scmp.eq.s32.totalorder %s24, 3
      %p100 = por %p98, %p99
      %p102 = scmp.ne.s32.totalorder %s85, %s101
      %p103 = scmp.eq.s32.totalorder %s24, 0
      %p104 = por %p102, %p103
      %s105 = ssub.s32 %s25, %s44
      %p106 = scmp.eq.s32.totalorder %s105, 0
      %s108 = sadd.s32 %s107, 1
      %s109 = scalar_select %p106, %s107, %s108
      %p112 = pneg %p106
      %p113 = scmp.eq.s32.totalorder %s18, 3
      %p114 = por %p112, %p113
      %p115 = scmp.ne.s32.totalorder %s107, %s110
      %p116 = scmp.eq.s32.totalorder %s18, 0
      %p117 = por %p115, %p116
      %p118 = scmp.ne.s32.totalorder %s107, %s110
      %p119 = scmp.eq.s32.totalorder %s23, 3
      %p120 = por %p118, %p119
      %p121 = scmp.ne.s32.totalorder %s110, %s111
      %p122 = scmp.eq.s32.totalorder %s23, 0
      %p123 = por %p121, %p122
      %p124 = scmp.ne.s32.totalorder %s110, %s111
      %p125 = scmp.eq.s32.totalorder %s24, 3
      %p126 = por %p124, %p125
      %p128 = scmp.ne.s32.totalorder %s111, %s127
      %p129 = scmp.eq.s32.totalorder %s24, 0
      %p130 = por %p128, %p129
      %s131 = ssub.s32 %s25, %s44
      %s132 = ssub.s32 %s26, %s40
      %s133 = sor.u32 %s131, %s132
      %p134 = scmp.eq.s32.totalorder %s133, 0
      %s136 = sadd.s32 %s135, 1
      %s137 = scalar_select %p134, %s135, %s136
      %p140 = pneg %p134
      %p141 = scmp.eq.s32.totalorder %s18, 3
      %p142 = por %p140, %p141
      %p143 = scmp.ne.s32.totalorder %s135, %s138
      %p144 = scmp.eq.s32.totalorder %s18, 0
      %p145 = por %p143, %p144
      %p146 = scmp.ne.s32.totalorder %s135, %s138
      %p147 = scmp.eq.s32.totalorder %s23, 3
      %p148 = por %p146, %p147
      %p149 = scmp.ne.s32.totalorder %s138, %s139
      %p150 = scmp.eq.s32.totalorder %s23, 0
      %p151 = por %p149, %p150
      %p152 = scmp.ne.s32.totalorder %s138, %s139
      %p153 = scmp.eq.s32.totalorder %s24, 3
      %p154 = por %p152, %p153
      %p156 = scmp.ne.s32.totalorder %s139, %s155
      %p157 = scmp.eq.s32.totalorder %s24, 0
      %p158 = por %p156, %p157
      %p159 = scmp.le.s32.totalorder 1, %s18
      %p160 = scmp.lt.s32.totalorder %s18, 5
      %p161 = pnand %p159, %p160
      %p162 = pneg %p161
      // Predicated region
      $region9: #{tpu_custom_call.1} parent=5 // pred_check
        _
      $region10: #{tpu_custom_call.1} parent=5 // pred_check_branch
        %164 = sbr.rel (%p161) target = $region12
      $region11: #{tpu_custom_call.1} parent=5 // pred_region
        %s165 = ssub.s32 %s18, 1
      $region12: #{tpu_custom_call.1} parent=5 // pred_fallthru
        _
      %p166 = scmp.lt.s32.totalorder %s18, 4
      // Predicated region
      $region13: #{tpu_custom_call.1} parent=5 // pred_check
        %p167 = pneg %p166
      $region14: #{tpu_custom_call.1} parent=5 // pred_check_branch
        %169 = sbr.rel (%p167) target = $region16
      $region15: #{tpu_custom_call.1} parent=5 // pred_region
        // Predicated region
        $region17: #{tpu_custom_call.1} parent=15 // pred_check
          %p170 = pneg %p61
        $region18: #{tpu_custom_call.1} parent=15 // pred_check_branch
          %172 = sbr.rel (%p170) target = $region20
        $region19: #{tpu_custom_call.1} parent=15 // pred_region
          %s173 = sand.u32 %s51, 1
          %s174 = scalar_lea.sflag [#allocation4], %s173
          %s175 = sand.u32 %s51, 1
          %s176 = smul.addr %s175, 4
          %s177 = scalar_lea.vmem [#allocation3], %s176
          %s179 = ssub.s32 64, 64
          %180 = vsyncadd %s174, %s179
          %s181 = sadd.s32 %s27, %s26
          %s182 = smul.addr %s25, 2
          %s183 = sadd.s32 %s181, %s182
          %s184 = smul.addr %s183, 64
          %s185 = scalar_lea.hbm %s0, %s184
          %s187 = sshll.u32 %s177, 4
          %s188 = int_to_ptr.vmem [resolvable:$true] %s187
          %190 = dma.hbm_to_vmem [thread:$0]  %s185, 64, %s188, %s174
        $region20: #{tpu_custom_call.1} parent=15 // pred_fallthru
          _
        // Predicated region
        $region21: #{tpu_custom_call.1} parent=15 // pred_check
          %p191 = pneg %p91
        $region22: #{tpu_custom_call.1} parent=15 // pred_check_branch
          %193 = sbr.rel (%p191) target = $region24
        $region23: #{tpu_custom_call.1} parent=15 // pred_region
          %s194 = sand.u32 %s81, 1
          %s195 = scalar_lea.sflag [#allocation7], %s194
          %s196 = sand.u32 %s81, 1
          %s197 = smul.addr %s196, 4
          %s198 = scalar_lea.vmem [#allocation6], %s197
          %s200 = ssub.s32 64, 64
          %201 = vsyncadd %s195, %s200
          %s202 = sadd.s32 %s27, %s26
          %s203 = smul.addr %s25, 2
          %s204 = sadd.s32 %s202, %s203
          %s205 = smul.addr %s204, 64
          %s206 = scalar_lea.hbm %s1, %s205
          %s208 = sshll.u32 %s198, 4
          %s209 = int_to_ptr.vmem [resolvable:$true] %s208
          %211 = dma.hbm_to_vmem [thread:$0]  %s206, 64, %s209, %s195
        $region24: #{tpu_custom_call.1} parent=15 // pred_fallthru
          _
        // Predicated region
        $region25: #{tpu_custom_call.1} parent=15 // pred_check
          %p212 = pneg %p117
        $region26: #{tpu_custom_call.1} parent=15 // pred_check_branch
          %214 = sbr.rel (%p212) target = $region28
        $region27: #{tpu_custom_call.1} parent=15 // pred_region
          %p215 = scmp.lt.s32.totalorder %s25, 1
          %s216 = scalar_select %p215, %s25, 1
          %s217 = scalar_lea.vmem %s2, %s216
        $region28: #{tpu_custom_call.1} parent=15 // pred_fallthru
          _
      $region16: #{tpu_custom_call.1} parent=5 // pred_fallthru
        _
      %p218 = scmp.le.s32.totalorder 1, %s18
      %p219 = scmp.lt.s32.totalorder %s18, 5
      %p220 = pnand %p218, %p219
      %p221 = pneg %p220
      // Predicated region
      $region29: #{tpu_custom_call.1} parent=5 // pred_check
        _
      $region30: #{tpu_custom_call.1} parent=5 // pred_check_branch
        %223 = sbr.rel (%p220) target = $region32
      $region31: #{tpu_custom_call.1} parent=5 // pred_region
        %s224 = ssub.s32 %s18, 1
        %s225 = sand.u32 %s54, 1
        %s226 = scalar_lea.sflag [#allocation4], %s225
        %s227 = sand.u32 %s54, 1
        %s228 = smul.addr %s227, 4
        %s229 = scalar_lea.vmem [#allocation3], %s228
        // Predicated region
        $region33: #{tpu_custom_call.1} parent=31 // pred_check
          %p230 = pneg %p67
        $region34: #{tpu_custom_call.1} parent=31 // pred_check_branch
          %232 = sbr.rel (%p230) target = $region36
        $region35: #{tpu_custom_call.1} parent=31 // pred_region
          %233 = dma.done %s226, 64
        $region36: #{tpu_custom_call.1} parent=31 // pred_fallthru
          _
        %s234 = sand.u32 %s84, 1
        %s235 = scalar_lea.sflag [#allocation7], %s234
        %s236 = sand.u32 %s84, 1
        %s237 = smul.addr %s236, 4
        %s238 = scalar_lea.vmem [#allocation6], %s237
        // Predicated region
        $region37: #{tpu_custom_call.1} parent=31 // pred_check
          %p239 = pneg %p97
        $region38: #{tpu_custom_call.1} parent=31 // pred_check_branch
          %241 = sbr.rel (%p239) target = $region40
        $region39: #{tpu_custom_call.1} parent=31 // pred_region
          %242 = dma.done %s235, 64
        $region40: #{tpu_custom_call.1} parent=31 // pred_fallthru
          _
        %s243 = sand.u32 %s54, 1
        %s244 = scalar_lea.sflag [#allocation4], %s243
        %s245 = sand.u32 %s54, 1
        %s246 = smul.addr %s245, 4
        %s247 = scalar_lea.vmem [#allocation3], %s246
        %p248 = pneg %p67
        %p249 = pneg %p64
        %s250 = sand.u32 %s84, 1
        %s251 = scalar_lea.sflag [#allocation7], %s250
        %s252 = sand.u32 %s84, 1
        %s253 = smul.addr %s252, 4
        %s254 = scalar_lea.vmem [#allocation6], %s253
        %p255 = pneg %p97
        %p256 = pneg %p94
        %p257 = scmp.lt.s32.totalorder %s28, 1
        %s258 = scalar_select %p257, %s28, 1
        %s259 = scalar_lea.vmem %s2, %s258
        %p260 = pneg %p123
        %p261 = pneg %p120
        %p262 = pneg %p151
        %p263 = pneg %p148
        %s264 = sand.u32 %s138, 1
        %s265 = scalar_lea.sflag [#allocation5], %s264
        %s266 = sand.u32 %s138, 1
        %s267 = smul.addr %s266, 8
        %s268 = scalar_lea.vmem [#allocation8], %s267
        %p269 = scmp.lt.s32.totalorder %s28, 1
        %s270 = scalar_select %p269, %s28, 1
        %s271 = scalar_lea.vmem %s2, %s270
        %p272 = scmp.eq.s32.totalorder %s30, 0
        // Predicated region
        $region41: #{tpu_custom_call.1} parent=31 // pred_check
          %p273 = pneg %p272
        $region42: #{tpu_custom_call.1} parent=31 // pred_check_branch
          %275 = sbr.rel (%p273) target = $region44
        $region43: #{tpu_custom_call.1} parent=31 // pred_region
          %276 = vst [vmem:[#allocation2] sm:$0xff] 0.0
        $region44: #{tpu_custom_call.1} parent=31 // pred_fallthru
          _
        %v277 = vld [vmem:[%s229] sm:$0xf]
        %v278 = vunpack.c.l.bf16 %v277
        %v279 = vld [vmem:[%s238] sm:$0xf]
        %v280 = vunpack.c.l.bf16 %v279
        %v281 = vand.u32 2147483647, %v278
        %v282 = vsub.f32 0.0, %v281
        %v283 = vmul.f32 %v282, 1.442695
        %v284 = vpow.pop %v283
        %v285 = vmax.f32 %v278, 0.0
        %v286 = vmul.f32 %v278, %v280
        %v287 = vsub.f32 %v285, %v286
        %v288 = vadd.f32 %v284, 1.0
        %v289 = vlog2.pop %v288
        %v290 = vmul.f32 %v289, 0.6931472
        %v291 = vmul.f32 -0.5, %v284
        %v292 = vadd.f32 %v291, 1.0
        %v293 = vmul.f32 %v292, %v284
        %v294 = vand.u32 2147483647, %v284
        %vm295 = vcmp.lt.f32.partialorder %v294, 0.0004427343
        %v296 = vsel %vm295, %v293, %v290
        %v297 = vadd.f32 %v287, %v296
        %v298 = vadd.f32 %v284, 1.0
        %v299 = vrcp.pop %v298
        %vm300 = vcmp.ge.f32.partialorder %v278, 0.0
        %v301 = vsub.f32 1.0, %v299
        %v302 = vsel %vm300, %v299, %v301
        %v303 = vmul.f32 %v302, 2.0
        %v304 = vsub.f32 1.0, %v303
        %v305 = vmul.f32 %v280, %v304
        %v306 = vadd.f32 %v302, %v305
        %v307 = vmul.f32 %v306, %v306
        %v308 = vmul.f32 %v297, %v307
        %v309 = vmul.f32 %v280, -0.5
        %v310 = vadd.f32 %v309, 0.75
        %v311 = vmul.f32 %v310, %v308
        %v312 = vld [vmem:[#allocation2] sm:$0xff]
        %v313 = vadd.f32 %v312, %v311
        %314 = vst [vmem:[#allocation2] sm:$0xff] %v313
        // Predicated region
        $region45: #{tpu_custom_call.1} parent=31 // pred_check
          %p315 = pneg %p272
        $region46: #{tpu_custom_call.1} parent=31 // pred_check_branch
          %317 = sbr.rel (%p315) target = $region48
        $region47: #{tpu_custom_call.1} parent=31 // pred_region
          %v318 = vld [vmem:[%s271] sm:$0x1]
          %vm319 = vcmp.gt.f32.partialorder %v318, 0.0
          %v320 = vld [vmem:[#allocation2] sm:$0xff]
          %v321 = vsel %vm319, 1, 0
          %v322 = vlaneseq
          %v323 = vshrl.u32 %v322, 7
          %v324 = vsub.s32 0, %v323
          %v325 = vrot.slane %v321, %v324
          %vm326 = vcmp.eq.s32.totalorder %v325, 1
          %v327 = vsel %vm326, %v320, 0.0
          %328 = vst [vmem:[%s268] sm:$0xff] %v327
        $region48: #{tpu_custom_call.1} parent=31 // pred_fallthru
          _
        %s329 = sand.u32 %s138, 1
        %s330 = scalar_lea.sflag [#allocation5], %s329
        %s331 = sand.u32 %s138, 1
        %s332 = smul.addr %s331, 8
        %s333 = scalar_lea.vmem [#allocation8], %s332
        // Predicated region
        $region49: #{tpu_custom_call.1} parent=31 // pred_check
          %p334 = pneg %p148
        $region50: #{tpu_custom_call.1} parent=31 // pred_check_branch
          %336 = sbr.rel (%p334) target = $region52
        $region51: #{tpu_custom_call.1} parent=31 // pred_region
          %s338 = ssub.s32 128, 128
          %339 = vsyncadd %s330, %s338
          %s340 = smul.addr %s28, 2
          %s341 = sadd.s32 %s29, %s340
          %s342 = smul.addr %s341, 128
          %s343 = scalar_lea.hbm %s3, %s342
          %s345 = sshll.u32 %s333, 4
          %s346 = int_to_ptr.vmem [resolvable:$true] %s345
          %348 = dma.vmem_to_hbm [thread:$0]  %s346, 128, %s343, %s330
        $region52: #{tpu_custom_call.1} parent=31 // pred_fallthru
          _
      $region32: #{tpu_custom_call.1} parent=5 // pred_fallthru
        _
      %p349 = scmp.le.s32.totalorder 2, %s18
      // Predicated region
      $region53: #{tpu_custom_call.1} parent=5 // pred_check
        %p350 = pneg %p349
      $region54: #{tpu_custom_call.1} parent=5 // pred_check_branch
        %352 = sbr.rel (%p350) target = $region56
      $region55: #{tpu_custom_call.1} parent=5 // pred_region
        %s353 = ssub.s32 %s18, 2
        // Predicated region
        $region57: #{tpu_custom_call.1} parent=55 // pred_check
          %p354 = pneg %p154
        $region58: #{tpu_custom_call.1} parent=55 // pred_check_branch
          %356 = sbr.rel (%p354) target = $region60
        $region59: #{tpu_custom_call.1} parent=55 // pred_region
          %s357 = sand.u32 %s139, 1
          %s358 = scalar_lea.sflag [#allocation5], %s357
          %s359 = sand.u32 %s139, 1
          %s360 = smul.addr %s359, 8
          %s361 = scalar_lea.vmem [#allocation8], %s360
          %362 = dma.done %s358, 128
        $region60: #{tpu_custom_call.1} parent=55 // pred_fallthru
          _
      $region56: #{tpu_custom_call.1} parent=5 // pred_fallthru
        _
    $region6: #{tpu_custom_call.1} parent=1 // loop_footer
      %s22 = sadd.s32 1, %s18
    $region7: #{tpu_custom_call.1} parent=1 // loop_footer_branch
      %17 = sbr.rel target = $region3
    $region8: #{tpu_custom_call.1} parent=1 // loop_exit
      _
    %363 = vsyncpa [#allocation4], 1
    %s364 = scalar_lea.sflag [#allocation4], 1
    %365 = vsyncpa %s364, 1
    %366 = vsyncpa [#allocation7], 1
    %s367 = scalar_lea.sflag [#allocation7], 1
    %368 = vsyncpa %s367, 1
    %369 = vsyncpa [#allocation5], 1
    %s370 = scalar_lea.sflag [#allocation5], 1
    %371 = vsyncpa %s370, 1

</llo_original>
